<compile_context>
chip_gen: v6e
topology: v6e:2x2x1
jax: 0.10.0
libtpu: 0.0.40
codegen_flags: <defaults>
</compile_context>

<pallas_src>
import jax
import jax.numpy as jnp
from jax import lax
from jax.experimental import pallas as pl
from jax.experimental.pallas import tpu as pltpu


LANES = 128
SUBS = 8

# ---------- small compatibility shims (keep runnable across jax builds) ------

_MS = getattr(pltpu, "MemorySpace", None) or getattr(pltpu, "TPUMemorySpace")
_SMEM = _MS.SMEM


def _compiler_params(**kwargs):
    cls = getattr(pltpu, "CompilerParams", None) or getattr(
        pltpu, "TPUCompilerParams", None)
    if cls is None:
        return None
    try:
        return cls(**kwargs)
    except TypeError:
        return None


# ---------------------- in-kernel PRNG availability probe --------------------

def _inkernel_rng_supported():
    """True iff pltpu.prng_seed + pltpu.stateful_normal lower & run here."""
    if not (hasattr(pltpu, "prng_seed") and hasattr(pltpu, "stateful_normal")):
        return False

    def probe_kernel(seed_ref, o_ref):
        pltpu.prng_seed(seed_ref[0])
        o_ref[...] = pltpu.stateful_normal(o_ref.shape, jnp.float32)

    try:
        out = pl.pallas_call(
            probe_kernel,
            out_shape=jax.ShapeDtypeStruct((8, 128), jnp.float32),
            grid=(1,),
            in_specs=[pl.BlockSpec(memory_space=_SMEM)],
            out_specs=pl.BlockSpec((8, 128), lambda i: (0, 0)),
        )(jnp.zeros((1,), jnp.int32))
        jax.block_until_ready(out)
        return bool(jnp.all(jnp.isfinite(out)))
    except Exception:  # any failure -> fall back to external-noise path
        return False


def _is_v7x():
    try:
        kind = jax.devices()[0].device_kind.lower()
    except Exception:
        return False
    return ("v7" in kind) or ("7x" in kind)


# ------------------------------- fused kernel --------------------------------

def _make_fused_kernel(num_ch, t_sub, nt, split, hw, use_inkernel_rng):
    """Fused: noise-add + (folded) 1x1-conv network + denoiser combine +
    squared-error accumulation, on sublane-dense (T_SUB, 128) channel planes."""
    px_per_blk = t_sub * LANES
    total_blocks = split * nt
    has_pad = (total_blocks * px_per_blk) != hw
    k0 = hw // px_per_blk  # first sublane-block that contains padded pixels

    def _body(x_ref, scal_ref, weff_ref, beff_ref, o_ref, noise_of):
        b = pl.program_id(0)     # sample       ("parallel")
        sp = pl.program_id(1)    # tile split   ("parallel", v7x megacore)
        t = pl.program_id(2)     # pixel tile   ("arbitrary", reduction)

        @pl.when(t == 0)
        def _init():
            o_ref[...] = jnp.zeros_like(o_ref)

        # per-sample scalars from SMEM (scalar path)
        sigma = scal_ref[0, b]
        c_skip = scal_ref[1, b]

        # dense (T_SUB, 128) channel planes
        x_ch = []
        noised = []
        for c in range(num_ch):
            xc = x_ref[c]
            nc = noise_of(c)
            x_ch.append(xc)
            noised.append(xc + sigma * nc)        # get_noised_input

        # folded EDM-preconditioned 1x1 conv + denoiser combine + diff^2.
        # diff_d = sum_c (c_in*c_out*W[c,d]) * noised_c
        #        + c_skip*noised_d - x_d + c_out*bias_d
        sq = None
        for d in range(num_ch):
            conv = noised[0] * weff_ref[b, d]
            for c in range(1, num_ch):
                conv = conv + weff_ref[b, c * num_ch + d] * noised[c]
            diff = conv + (c_skip * noised[d] - x_ch[d] + beff_ref[b, d])
            contrib = diff * diff
            sq = contrib if sq is None else sq + contrib

        def _accum(v):
            # (T_SUB,128) -> (8,128): pure VALU vreg adds, accumulate into the
            # resident output block (acts as the per-(b,split) accumulator).
            o_ref[...] = o_ref[...] + v.reshape(t_sub // SUBS, SUBS, LANES).sum(0)

        if has_pad:
            blk = sp * nt + t
            is_tail = blk >= k0

            @pl.when(is_tail)
            def _masked():
                sub = lax.broadcasted_iota(jnp.int32, (t_sub, LANES), 0)
                lane = lax.broadcasted_iota(jnp.int32, (t_sub, LANES), 1)
                pix = (blk * t_sub + sub) * LANES + lane
                _accum(jnp.where(pix < hw, sq, 0.0))

            @pl.when(jnp.logical_not(is_tail))
            def _plain():
                _accum(sq)
        else:
            _accum(sq)

    if use_inkernel_rng:
        def kernel(x_ref, seed_ref, scal_ref, weff_ref, beff_ref, o_ref):
            b = pl.program_id(0)
            sp = pl.program_id(1)
            t = pl.program_id(2)
            cell = (b * split + sp) * nt + t
            # mix with a large odd constant so adjacent cells get well-separated
            # seeds (consecutive-integer seeds can correlate).
            pltpu.prng_seed(seed_ref[0] + cell * jnp.int32(1000003))

            def noise_of(c):
                del c
                return pltpu.stateful_normal((t_sub, LANES), jnp.float32)

            _body(x_ref, scal_ref, weff_ref, beff_ref, o_ref, noise_of)

        return kernel

    def kernel(x_ref, noise_ref, scal_ref, weff_ref, beff_ref, o_ref):
        def noise_of(c):
            return noise_ref[c].astype(jnp.float32)

        _body(x_ref, scal_ref, weff_ref, beff_ref, o_ref, noise_of)

    return kernel


# ------------------------------ helpers ---------------------------------------

def _choose_tiling(hw, num_ch, split, tile_sublanes=None,
                   target_bytes=2 << 20, max_sub=2048):
    """Pick T_SUB (multiple of 8) targeting ~2 MiB of x per block and the padded
    sublane count / tiles-per-split.  hw need not divide the tile; tail tiles
    are masked in-kernel."""
    s = -(-hw // LANES)                                  # sublanes needed
    if tile_sublanes is not None:
        t_sub = max(SUBS, (tile_sublanes // SUBS) * SUBS)
    else:
        tgt = target_bytes // (num_ch * 4 * LANES)
        tgt = max(SUBS, min(max_sub, (tgt // SUBS) * SUBS))
        if s <= tgt * split:
            t_sub = max(SUBS, ((-(-s // split) + SUBS - 1) // SUBS) * SUBS)
        else:
            t_sub = tgt
    chunk = t_sub * split
    s_pad = -(-s // chunk) * chunk
    nt = s_pad // chunk
    return t_sub, s_pad, nt


def _sample_sigmas(key, batch, p_mean=-1.2, p_std=1.2):
    # sigma_sampler stub: EDM log-normal
    return jnp.exp(p_mean + p_std * jax.random.normal(key, (batch,), jnp.float32))


def _edm_scalars(sigmas, sigma_data=0.5):
    # loss_weighting + denoiser preconditioning stubs (EDM)
    denom = sigmas ** 2 + sigma_data ** 2
    c_skip = sigma_data ** 2 / denom
    c_out = sigmas * sigma_data / jnp.sqrt(denom)
    c_in = 1.0 / jnp.sqrt(denom)
    w = denom / (sigmas * sigma_data) ** 2
    return c_skip, c_out, c_in, w


# --------------------------- full forward pass --------------------------------

def standard_diffusion_loss_forward(x_nchw, net_w, net_b, key, *,
                                    use_inkernel_rng=False,
                                    num_splits=1,
                                    tile_sublanes=None,
                                    noise_dtype=jnp.float32):
    """StandardDiffusionLoss._forward for range_image=None,
    replace_cond_frames=False, offset_noise_level=0, loss_type='l2',
    use_additional_loss=False, calc_dec_loss=False.
    Returns (loss, camera_loss, range_image_loss)."""
    B, C, H, W = x_nchw.shape
    HW = H * W
    D = C * HW
    k_sig, k_noise = jax.random.split(key)

    sigmas = _sample_sigmas(k_sig, B)                      # (B,)
    c_skip, c_out, c_in, w = _edm_scalars(sigmas)          # (B,)

    # fold EDM pre/post-conditioning into the 1x1-conv "network" weights
    w32 = net_w.astype(jnp.float32)                        # (C, C)  W[c, d]
    b32 = net_b.reshape(C).astype(jnp.float32)             # (C,)
    w_eff = ((c_in * c_out)[:, None, None] * w32[None]).reshape(B, C * C)
    b_eff = c_out[:, None] * b32[None]                     # (B, C)
    scal = jnp.stack([sigmas, c_skip], axis=0).astype(jnp.float32)   # (2, B)

    t_sub, s_pad, nt = _choose_tiling(HW, C, num_splits, tile_sublanes)
    hw_pad = s_pad * LANES

    def to_tiles(a_flat):                                  # (B,C,HW) -> (B,C,S,128)
        if hw_pad != HW:
            a_flat = jnp.pad(a_flat, ((0, 0), (0, 0), (0, hw_pad - HW)))
        return a_flat.reshape(B, C, s_pad, LANES)

    x4 = to_tiles(x_nchw.reshape(B, C, HW).astype(jnp.float32))

    x_spec = pl.BlockSpec((None, C, t_sub, LANES),
                          lambda b, sp, t: (b, 0, sp * nt + t, 0))
    smem_spec = pl.BlockSpec(memory_space=_SMEM)
    out_spec = pl.BlockSpec((None, None, SUBS, LANES),
                            lambda b, sp, t: (b, sp, 0, 0))

    kernel = _make_fused_kernel(C, t_sub, nt, num_splits, HW, use_inkernel_rng)
    if use_inkernel_rng:
        seed = jax.random.randint(k_noise, (1,), 0,
                                  jnp.iinfo(jnp.int32).max, dtype=jnp.int32)
        operands = (x4, seed, scal, w_eff, b_eff)
        in_specs = [x_spec, smem_spec, smem_spec, smem_spec, smem_spec]
    else:
        noise = jax.random.normal(k_noise, (B, C, HW), jnp.float32)
        noise4 = to_tiles(noise).astype(noise_dtype)
        operands = (x4, noise4, scal, w_eff, b_eff)
        in_specs = [x_spec, x_spec, smem_spec, smem_spec, smem_spec]

    partials = pl.pallas_call(
        kernel,
        out_shape=jax.ShapeDtypeStruct((B, num_splits, SUBS, LANES), jnp.float32),
        grid=(B, num_splits, nt),
        in_specs=in_specs,
        out_specs=out_spec,
        compiler_params=_compiler_params(
            dimension_semantics=("parallel", "parallel", "arbitrary"),
            vmem_limit_bytes=48 * 1024 * 1024,
        ),
    )(*operands)

    # per-sample mean of w*(pred-x)^2 == (w/D) * sum(diff^2); the tiny partial
    # reduction and the mean over B stay in XLA.
    per_sample_sum = jnp.sum(partials, axis=(1, 2, 3))     # (B,)
    per_sample = (w / D) * per_sample_sum
    camera_loss = jnp.mean(per_sample)
    loss = camera_loss
    range_image_loss = camera_loss
    return loss, camera_loss, range_image_loss


# ------------------------- pure-JAX reference (validation) --------------------

def _reference_forward(x_nchw, net_w, net_b, key):
    B, C, H, W = x_nchw.shape
    HW = H * W
    k_sig, k_noise = jax.random.split(key)
    sigmas = _sample_sigmas(k_sig, B)
    c_skip, c_out, c_in, w = _edm_scalars(sigmas)
    x3 = x_nchw.reshape(B, C, HW).astype(jnp.float32)
    noise = jax.random.normal(k_noise, (B, C, HW), jnp.float32)
    noised = x3 + sigmas[:, None, None] * noise
    net_in = c_in[:, None, None] * noised
    net_out = (jnp.einsum("cd,bcp->bdp", net_w.astype(jnp.float32), net_in,
                          precision="highest")
               + net_b.reshape(1, C, 1).astype(jnp.float32))
    model_out = c_skip[:, None, None] * noised + c_out[:, None, None] * net_out
    per_sample = jnp.mean(w[:, None, None] * (model_out - x3) ** 2, axis=(1, 2))
    camera_loss = jnp.mean(per_sample)
    return camera_loss, camera_loss, camera_loss


# ------------------------------- driver ---------------------------------------

if __name__ == "__main__":
    key = jax.random.PRNGKey(0)
    kx, kw, kb, kfwd, kx2, kfwd2 = jax.random.split(key, 6)

    B, C, H, W = 2, 4, 16, 16
    x = jax.random.normal(kx, (B, C, H, W), jnp.float32)

    # deterministic synthetic "network" parameters (1x1 conv: C -> C)
    net_w = 0.1 * jax.random.normal(kw, (C, C), jnp.float32)
    net_b = 0.01 * jax.random.normal(kb, (1, C), jnp.float32)

    fwd = jax.jit(standard_diffusion_loss_forward,
                  static_argnames=("use_inkernel_rng", "num_splits",
                                   "tile_sublanes", "noise_dtype"))

    # 1) validate fused-kernel math vs pure-JAX reference (shared-noise path,
    #    default tiling, single split)
    ref_loss, _, _ = _reference_forward(x, net_w, net_b, kfwd)
    chk_loss, _, _ = fwd(x, net_w, net_b, kfwd, use_inkernel_rng=False)
    jax.block_until_ready(chk_loss)
    assert bool(jnp.allclose(chk_loss, ref_loss, rtol=1e-4, atol=1e-5)), \
        (chk_loss, ref_loss)

    # 2) validate multi-tile accumulation + megacore split + tail masking
    #    (B=1, HW not a multiple of the tile) vs the reference
    x2 = jax.random.normal(kx2, (1, C, 40, 56), jnp.float32)
    ref2, _, _ = _reference_forward(x2, net_w, net_b, kfwd2)
    chk2, _, _ = fwd(x2, net_w, net_b, kfwd2, use_inkernel_rng=False,
                     num_splits=2, tile_sublanes=8)
    jax.block_until_ready(chk2)
    assert bool(jnp.allclose(chk2, ref2, rtol=1e-4, atol=1e-5)), (chk2, ref2)

    # 3) fast path: in-kernel PRNG on v5e/v6e (halves HBM traffic); external
    #    noise preferred on v7x where Box-Muller is EUP-bound.
    use_rng = _inkernel_rng_supported() and not _is_v7x()
    loss, camera_loss, range_image_loss = fwd(
        x, net_w, net_b, kfwd, use_inkernel_rng=use_rng)
    jax.block_until_ready(loss)

    assert loss.shape == () and camera_loss.shape == () and range_image_loss.shape == ()
    assert bool(jnp.isfinite(loss))
    print("KERNEL_OK")
</pallas_src>

<mosaic_0001>
module attributes {stable_mosaic.version = 11 : i64} {
  func.func @kernel(%arg0: i32, %arg1: i32, %arg2: i32, %arg3: memref<1x4x8x128xf32, #tpu.memory_space<vmem>>, %arg4: memref<1x4x8x128xf32, #tpu.memory_space<vmem>>, %arg5: memref<2x2xf32, #tpu.memory_space<smem>>, %arg6: memref<2x16xf32, #tpu.memory_space<smem>>, %arg7: memref<2x4xf32, #tpu.memory_space<smem>>, %arg8: memref<1x1x8x128xf32, #tpu.memory_space<vmem>>) attributes {dimension_semantics = [#tpu.dimension_semantics<parallel>, #tpu.dimension_semantics<parallel>, #tpu.dimension_semantics<arbitrary>], iteration_bounds = array<i64: 2, 1, 1>, scalar_prefetch = 0 : i64, scratch_operands = 0 : i64, tpu.core_type = #tpu.core_type<tc>, window_params = [{transform_indices = @transform_0, window_bounds = array<i64: 1, 4, 8, 128>}, {transform_indices = @transform_1, window_bounds = array<i64: 1, 4, 8, 128>}, {transform_indices = @transform_2, window_bounds = array<i64: 2, 2>}, {transform_indices = @transform_3, window_bounds = array<i64: 2, 16>}, {transform_indices = @transform_4, window_bounds = array<i64: 2, 4>}, {transform_indices = @transform_5, window_bounds = array<i64: 1, 1, 8, 128>}]} {
    %c0_i32 = arith.constant 0 : i32
    %0 = arith.cmpi eq, %arg2, %c0_i32 : i32
    %1 = arith.extui %0 : i1 to i32
    %c0_i32_0 = arith.constant 0 : i32
    %2 = arith.cmpi ne, %1, %c0_i32_0 : i32
    scf.if %2 {
      %cst = arith.constant 0.000000e+00 : f32
      %158 = vector.broadcast %cst : f32 to vector<8x128xf32>
      %c0_42 = arith.constant 0 : index
      %c0_43 = arith.constant 0 : index
      %c0_44 = arith.constant 0 : index
      %c0_45 = arith.constant 0 : index
      %159 = vector.load %arg8[%c0_42, %c0_43, %c0_44, %c0_45] : memref<1x1x8x128xf32, #tpu.memory_space<vmem>>, vector<1x1x8x128xf32>
      %160 = vector.shape_cast %159 : vector<1x1x8x128xf32> to vector<8x128xf32>
      %161 = vector.shape_cast %158 : vector<8x128xf32> to vector<1x1x8x128xf32>
      tpu.vector_store %arg8[%c0_42, %c0_43, %c0_44, %c0_45], %161 {strides = array<i32>} : memref<1x1x8x128xf32, #tpu.memory_space<vmem>>, vector<1x1x8x128xf32>,
    } else {
    }
    %c0 = arith.constant 0 : index
    %3 = arith.index_cast %arg0 : i32 to index
    %4 = memref.load %arg5[%c0, %3] : memref<2x2xf32, #tpu.memory_space<smem>>
    %c1 = arith.constant 1 : index
    %5 = arith.index_cast %arg0 : i32 to index
    %6 = memref.load %arg5[%c1, %5] : memref<2x2xf32, #tpu.memory_space<smem>>
    %c0_1 = arith.constant 0 : index
    %c0_2 = arith.constant 0 : index
    %c0_3 = arith.constant 0 : index
    %c0_4 = arith.constant 0 : index
    %7 = vector.load %arg3[%c0_1, %c0_2, %c0_3, %c0_4] : memref<1x4x8x128xf32, #tpu.memory_space<vmem>>, vector<1x1x8x128xf32>
    %8 = vector.shape_cast %7 : vector<1x1x8x128xf32> to vector<8x128xf32>
    %c0_5 = arith.constant 0 : index
    %c0_6 = arith.constant 0 : index
    %c0_7 = arith.constant 0 : index
    %c0_8 = arith.constant 0 : index
    %9 = vector.load %arg4[%c0_5, %c0_6, %c0_7, %c0_8] : memref<1x4x8x128xf32, #tpu.memory_space<vmem>>, vector<1x1x8x128xf32>
    %10 = vector.shape_cast %9 : vector<1x1x8x128xf32> to vector<8x128xf32>
    %11 = vector.broadcast %4 : f32 to vector<8x128xf32>
    %12 = arith.mulf %11, %10 : vector<8x128xf32>
    %13 = arith.addf %8, %12 : vector<8x128xf32>
    %c0_9 = arith.constant 0 : index
    %c1_10 = arith.constant 1 : index
    %c0_11 = arith.constant 0 : index
    %c0_12 = arith.constant 0 : index
    %14 = vector.load %arg3[%c0_9, %c1_10, %c0_11, %c0_12] : memref<1x4x8x128xf32, #tpu.memory_space<vmem>>, vector<1x1x8x128xf32>
    %15 = vector.shape_cast %14 : vector<1x1x8x128xf32> to vector<8x128xf32>
    %c0_13 = arith.constant 0 : index
    %c1_14 = arith.constant 1 : index
    %c0_15 = arith.constant 0 : index
    %c0_16 = arith.constant 0 : index
    %16 = vector.load %arg4[%c0_13, %c1_14, %c0_15, %c0_16] : memref<1x4x8x128xf32, #tpu.memory_space<vmem>>, vector<1x1x8x128xf32>
    %17 = vector.shape_cast %16 : vector<1x1x8x128xf32> to vector<8x128xf32>
    %18 = vector.broadcast %4 : f32 to vector<8x128xf32>
    %19 = arith.mulf %18, %17 : vector<8x128xf32>
    %20 = arith.addf %15, %19 : vector<8x128xf32>
    %c0_17 = arith.constant 0 : index
    %c2 = arith.constant 2 : index
    %c0_18 = arith.constant 0 : index
    %c0_19 = arith.constant 0 : index
    %21 = vector.load %arg3[%c0_17, %c2, %c0_18, %c0_19] : memref<1x4x8x128xf32, #tpu.memory_space<vmem>>, vector<1x1x8x128xf32>
    %22 = vector.shape_cast %21 : vector<1x1x8x128xf32> to vector<8x128xf32>
    %c0_20 = arith.constant 0 : index
    %c2_21 = arith.constant 2 : index
    %c0_22 = arith.constant 0 : index
    %c0_23 = arith.constant 0 : index
    %23 = vector.load %arg4[%c0_20, %c2_21, %c0_22, %c0_23] : memref<1x4x8x128xf32, #tpu.memory_space<vmem>>, vector<1x1x8x128xf32>
    %24 = vector.shape_cast %23 : vector<1x1x8x128xf32> to vector<8x128xf32>
    %25 = vector.broadcast %4 : f32 to vector<8x128xf32>
    %26 = arith.mulf %25, %24 : vector<8x128xf32>
    %27 = arith.addf %22, %26 : vector<8x128xf32>
    %c0_24 = arith.constant 0 : index
    %c3 = arith.constant 3 : index
    %c0_25 = arith.constant 0 : index
    %c0_26 = arith.constant 0 : index
    %28 = vector.load %arg3[%c0_24, %c3, %c0_25, %c0_26] : memref<1x4x8x128xf32, #tpu.memory_space<vmem>>, vector<1x1x8x128xf32>
    %29 = vector.shape_cast %28 : vector<1x1x8x128xf32> to vector<8x128xf32>
    %c0_27 = arith.constant 0 : index
    %c3_28 = arith.constant 3 : index
    %c0_29 = arith.constant 0 : index
    %c0_30 = arith.constant 0 : index
    %30 = vector.load %arg4[%c0_27, %c3_28, %c0_29, %c0_30] : memref<1x4x8x128xf32, #tpu.memory_space<vmem>>, vector<1x1x8x128xf32>
    %31 = vector.shape_cast %30 : vector<1x1x8x128xf32> to vector<8x128xf32>
    %32 = vector.broadcast %4 : f32 to vector<8x128xf32>
    %33 = arith.mulf %32, %31 : vector<8x128xf32>
    %34 = arith.addf %29, %33 : vector<8x128xf32>
    %35 = arith.index_cast %arg0 : i32 to index
    %c0_31 = arith.constant 0 : index
    %36 = memref.load %arg6[%35, %c0_31] : memref<2x16xf32, #tpu.memory_space<smem>>
    %37 = vector.broadcast %36 : f32 to vector<8x128xf32>
    %38 = arith.mulf %13, %37 : vector<8x128xf32>
    %39 = arith.index_cast %arg0 : i32 to index
    %c4 = arith.constant 4 : index
    %40 = memref.load %arg6[%39, %c4] : memref<2x16xf32, #tpu.memory_space<smem>>
    %41 = vector.broadcast %40 : f32 to vector<8x128xf32>
    %42 = arith.mulf %41, %20 : vector<8x128xf32>
    %43 = arith.addf %38, %42 : vector<8x128xf32>
    %44 = arith.index_cast %arg0 : i32 to index
    %c8 = arith.constant 8 : index
    %45 = memref.load %arg6[%44, %c8] : memref<2x16xf32, #tpu.memory_space<smem>>
    %46 = vector.broadcast %45 : f32 to vector<8x128xf32>
    %47 = arith.mulf %46, %27 : vector<8x128xf32>
    %48 = arith.addf %43, %47 : vector<8x128xf32>
    %49 = arith.index_cast %arg0 : i32 to index
    %c12 = arith.constant 12 : index
    %50 = memref.load %arg6[%49, %c12] : memref<2x16xf32, #tpu.memory_space<smem>>
    %51 = vector.broadcast %50 : f32 to vector<8x128xf32>
    %52 = arith.mulf %51, %34 : vector<8x128xf32>
    %53 = arith.addf %48, %52 : vector<8x128xf32>
    %54 = vector.broadcast %6 : f32 to vector<8x128xf32>
    %55 = arith.mulf %54, %13 : vector<8x128xf32>
    %56 = arith.subf %55, %8 : vector<8x128xf32>
    %57 = arith.index_cast %arg0 : i32 to index
    %c0_32 = arith.constant 0 : index
    %58 = memref.load %arg7[%57, %c0_32] : memref<2x4xf32, #tpu.memory_space<smem>>
    %59 = vector.broadcast %58 : f32 to vector<8x128xf32>
    %60 = arith.addf %56, %59 : vector<8x128xf32>
    %61 = arith.addf %53, %60 : vector<8x128xf32>
    %62 = arith.mulf %61, %61 : vector<8x128xf32>
    %63 = arith.index_cast %arg0 : i32 to index
    %c1_33 = arith.constant 1 : index
    %64 = memref.load %arg6[%63, %c1_33] : memref<2x16xf32, #tpu.memory_space<smem>>
    %65 = vector.broadcast %64 : f32 to vector<8x128xf32>
    %66 = arith.mulf %13, %65 : vector<8x128xf32>
    %67 = arith.index_cast %arg0 : i32 to index
    %c5 = arith.constant 5 : index
    %68 = memref.load %arg6[%67, %c5] : memref<2x16xf32, #tpu.memory_space<smem>>
    %69 = vector.broadcast %68 : f32 to vector<8x128xf32>
    %70 = arith.mulf %69, %20 : vector<8x128xf32>
    %71 = arith.addf %66, %70 : vector<8x128xf32>
    %72 = arith.index_cast %arg0 : i32 to index
    %c9 = arith.constant 9 : index
    %73 = memref.load %arg6[%72, %c9] : memref<2x16xf32, #tpu.memory_space<smem>>
    %74 = vector.broadcast %73 : f32 to vector<8x128xf32>
    %75 = arith.mulf %74, %27 : vector<8x128xf32>
    %76 = arith.addf %71, %75 : vector<8x128xf32>
    %77 = arith.index_cast %arg0 : i32 to index
    %c13 = arith.constant 13 : index
    %78 = memref.load %arg6[%77, %c13] : memref<2x16xf32, #tpu.memory_space<smem>>
    %79 = vector.broadcast %78 : f32 to vector<8x128xf32>
    %80 = arith.mulf %79, %34 : vector<8x128xf32>
    %81 = arith.addf %76, %80 : vector<8x128xf32>
    %82 = vector.broadcast %6 : f32 to vector<8x128xf32>
    %83 = arith.mulf %82, %20 : vector<8x128xf32>
    %84 = arith.subf %83, %15 : vector<8x128xf32>
    %85 = arith.index_cast %arg0 : i32 to index
    %c1_34 = arith.constant 1 : index
    %86 = memref.load %arg7[%85, %c1_34] : memref<2x4xf32, #tpu.memory_space<smem>>
    %87 = vector.broadcast %86 : f32 to vector<8x128xf32>
    %88 = arith.addf %84, %87 : vector<8x128xf32>
    %89 = arith.addf %81, %88 : vector<8x128xf32>
    %90 = arith.mulf %89, %89 : vector<8x128xf32>
    %91 = arith.addf %62, %90 : vector<8x128xf32>
    %92 = arith.index_cast %arg0 : i32 to index
    %c2_35 = arith.constant 2 : index
    %93 = memref.load %arg6[%92, %c2_35] : memref<2x16xf32, #tpu.memory_space<smem>>
    %94 = vector.broadcast %93 : f32 to vector<8x128xf32>
    %95 = arith.mulf %13, %94 : vector<8x128xf32>
    %96 = arith.index_cast %arg0 : i32 to index
    %c6 = arith.constant 6 : index
    %97 = memref.load %arg6[%96, %c6] : memref<2x16xf32, #tpu.memory_space<smem>>
    %98 = vector.broadcast %97 : f32 to vector<8x128xf32>
    %99 = arith.mulf %98, %20 : vector<8x128xf32>
    %100 = arith.addf %95, %99 : vector<8x128xf32>
    %101 = arith.index_cast %arg0 : i32 to index
    %c10 = arith.constant 10 : index
    %102 = memref.load %arg6[%101, %c10] : memref<2x16xf32, #tpu.memory_space<smem>>
    %103 = vector.broadcast %102 : f32 to vector<8x128xf32>
    %104 = arith.mulf %103, %27 : vector<8x128xf32>
    %105 = arith.addf %100, %104 : vector<8x128xf32>
    %106 = arith.index_cast %arg0 : i32 to index
    %c14 = arith.constant 14 : index
    %107 = memref.load %arg6[%106, %c14] : memref<2x16xf32, #tpu.memory_space<smem>>
    %108 = vector.broadcast %107 : f32 to vector<8x128xf32>
    %109 = arith.mulf %108, %34 : vector<8x128xf32>
    %110 = arith.addf %105, %109 : vector<8x128xf32>
    %111 = vector.broadcast %6 : f32 to vector<8x128xf32>
    %112 = arith.mulf %111, %27 : vector<8x128xf32>
    %113 = arith.subf %112, %22 : vector<8x128xf32>
    %114 = arith.index_cast %arg0 : i32 to index
    %c2_36 = arith.constant 2 : index
    %115 = memref.load %arg7[%114, %c2_36] : memref<2x4xf32, #tpu.memory_space<smem>>
    %116 = vector.broadcast %115 : f32 to vector<8x128xf32>
    %117 = arith.addf %113, %116 : vector<8x128xf32>
    %118 = arith.addf %110, %117 : vector<8x128xf32>
    %119 = arith.mulf %118, %118 : vector<8x128xf32>
    %120 = arith.addf %91, %119 : vector<8x128xf32>
    %121 = arith.index_cast %arg0 : i32 to index
    %c3_37 = arith.constant 3 : index
    %122 = memref.load %arg6[%121, %c3_37] : memref<2x16xf32, #tpu.memory_space<smem>>
    %123 = vector.broadcast %122 : f32 to vector<8x128xf32>
    %124 = arith.mulf %13, %123 : vector<8x128xf32>
    %125 = arith.index_cast %arg0 : i32 to index
    %c7 = arith.constant 7 : index
    %126 = memref.load %arg6[%125, %c7] : memref<2x16xf32, #tpu.memory_space<smem>>
    %127 = vector.broadcast %126 : f32 to vector<8x128xf32>
    %128 = arith.mulf %127, %20 : vector<8x128xf32>
    %129 = arith.addf %124, %128 : vector<8x128xf32>
    %130 = arith.index_cast %arg0 : i32 to index
    %c11 = arith.constant 11 : index
    %131 = memref.load %arg6[%130, %c11] : memref<2x16xf32, #tpu.memory_space<smem>>
    %132 = vector.broadcast %131 : f32 to vector<8x128xf32>
    %133 = arith.mulf %132, %27 : vector<8x128xf32>
    %134 = arith.addf %129, %133 : vector<8x128xf32>
    %135 = arith.index_cast %arg0 : i32 to index
    %c15 = arith.constant 15 : index
    %136 = memref.load %arg6[%135, %c15] : memref<2x16xf32, #tpu.memory_space<smem>>
    %137 = vector.broadcast %136 : f32 to vector<8x128xf32>
    %138 = arith.mulf %137, %34 : vector<8x128xf32>
    %139 = arith.addf %134, %138 : vector<8x128xf32>
    %140 = vector.broadcast %6 : f32 to vector<8x128xf32>
    %141 = arith.mulf %140, %34 : vector<8x128xf32>
    %142 = arith.subf %141, %29 : vector<8x128xf32>
    %143 = arith.index_cast %arg0 : i32 to index
    %c3_38 = arith.constant 3 : index
    %144 = memref.load %arg7[%143, %c3_38] : memref<2x4xf32, #tpu.memory_space<smem>>
    %145 = vector.broadcast %144 : f32 to vector<8x128xf32>
    %146 = arith.addf %142, %145 : vector<8x128xf32>
    %147 = arith.addf %139, %146 : vector<8x128xf32>
    %148 = arith.mulf %147, %147 : vector<8x128xf32>
    %149 = arith.addf %120, %148 : vector<8x128xf32>
    %c1_i32 = arith.constant 1 : i32
    %150 = arith.muli %arg1, %c1_i32 : i32
    %151 = arith.addi %150, %arg2 : i32
    %c0_i32_39 = arith.constant 0 : i32
    %152 = arith.cmpi sge, %151, %c0_i32_39 : i32
    %153 = arith.extui %152 : i1 to i32
    %c0_i32_40 = arith.constant 0 : i32
    %154 = arith.cmpi ne, %153, %c0_i32_40 : i32
    scf.if %154 {
      %158 = tpu.iota {dimensions = array<i32: 0>} : vector<8x128xi32>
      %159 = tpu.iota {dimensions = array<i32: 1>} : vector<8x128xi32>
      %c8_i32 = arith.constant 8 : i32
      %160 = arith.muli %151, %c8_i32 : i32
      %161 = vector.broadcast %160 : i32 to vector<8x128xi32>
      %162 = arith.addi %161, %158 : vector<8x128xi32>
      %c128_i32 = arith.constant 128 : i32
      %163 = vector.broadcast %c128_i32 : i32 to vector<8x128xi32>
      %164 = arith.muli %162, %163 : vector<8x128xi32>
      %165 = arith.addi %164, %159 : vector<8x128xi32>
      %c256_i32 = arith.constant 256 : i32
      %166 = vector.broadcast %c256_i32 : i32 to vector<8x128xi32>
      %167 = arith.cmpi slt, %165, %166 : vector<8x128xi32>
      %cst = arith.constant 0.000000e+00 : f32
      %168 = vector.broadcast %cst : f32 to vector<8x128xf32>
      %169 = arith.select %167, %149, %168 : vector<8x128xi1>, vector<8x128xf32>
      %c0_42 = arith.constant 0 : index
      %c0_43 = arith.constant 0 : index
      %c0_44 = arith.constant 0 : index
      %c0_45 = arith.constant 0 : index
      %170 = vector.load %arg8[%c0_42, %c0_43, %c0_44, %c0_45] : memref<1x1x8x128xf32, #tpu.memory_space<vmem>>, vector<1x1x8x128xf32>
      %171 = vector.shape_cast %170 : vector<1x1x8x128xf32> to vector<8x128xf32>
      %172 = vector.shape_cast %169 : vector<8x128xf32> to vector<1x8x128xf32>
      %cst_46 = arith.constant dense<0.000000e+00> : vector<8x128xf32>
      %173 = vector.multi_reduction <add>, %172, %cst_46 [0] : vector<1x8x128xf32> to vector<8x128xf32>
      %174 = arith.addf %171, %173 : vector<8x128xf32>
      %c0_47 = arith.constant 0 : index
      %c0_48 = arith.constant 0 : index
      %c0_49 = arith.constant 0 : index
      %c0_50 = arith.constant 0 : index
      %175 = vector.load %arg8[%c0_47, %c0_48, %c0_49, %c0_50] : memref<1x1x8x128xf32, #tpu.memory_space<vmem>>, vector<1x1x8x128xf32>
      %176 = vector.shape_cast %175 : vector<1x1x8x128xf32> to vector<8x128xf32>
      %177 = vector.shape_cast %174 : vector<8x128xf32> to vector<1x1x8x128xf32>
      tpu.vector_store %arg8[%c0_47, %c0_48, %c0_49, %c0_50], %177 {strides = array<i32>} : memref<1x1x8x128xf32, #tpu.memory_space<vmem>>, vector<1x1x8x128xf32>,
    } else {
    }
    %true = arith.constant true
    %155 = arith.xori %152, %true : i1
    %156 = arith.extui %155 : i1 to i32
    %c0_i32_41 = arith.constant 0 : i32
    %157 = arith.cmpi ne, %156, %c0_i32_41 : i32
    scf.if %157 {
      %c0_42 = arith.constant 0 : index
      %c0_43 = arith.constant 0 : index
      %c0_44 = arith.constant 0 : index
      %c0_45 = arith.constant 0 : index
      %158 = vector.load %arg8[%c0_42, %c0_43, %c0_44, %c0_45] : memref<1x1x8x128xf32, #tpu.memory_space<vmem>>, vector<1x1x8x128xf32>
      %159 = vector.shape_cast %158 : vector<1x1x8x128xf32> to vector<8x128xf32>
      %160 = vector.shape_cast %149 : vector<8x128xf32> to vector<1x8x128xf32>
      %cst = arith.constant dense<0.000000e+00> : vector<8x128xf32>
      %161 = vector.multi_reduction <add>, %160, %cst [0] : vector<1x8x128xf32> to vector<8x128xf32>
      %162 = arith.addf %159, %161 : vector<8x128xf32>
      %c0_46 = arith.constant 0 : index
      %c0_47 = arith.constant 0 : index
      %c0_48 = arith.constant 0 : index
      %c0_49 = arith.constant 0 : index
      %163 = vector.load %arg8[%c0_46, %c0_47, %c0_48, %c0_49] : memref<1x1x8x128xf32, #tpu.memory_space<vmem>>, vector<1x1x8x128xf32>
      %164 = vector.shape_cast %163 : vector<1x1x8x128xf32> to vector<8x128xf32>
      %165 = vector.shape_cast %162 : vector<8x128xf32> to vector<1x1x8x128xf32>
      tpu.vector_store %arg8[%c0_46, %c0_47, %c0_48, %c0_49], %165 {strides = array<i32>} : memref<1x1x8x128xf32, #tpu.memory_space<vmem>>, vector<1x1x8x128xf32>,
    } else {
    }
    return
  }
  func.func @transform_0(%arg0: i32, %arg1: i32, %arg2: i32) -> (i32, i32, i32, i32) {
    %c1_i32 = arith.constant 1 : i32
    %0 = arith.muli %arg1, %c1_i32 : i32
    %1 = arith.addi %0, %arg2 : i32
    %c0_i32 = arith.constant 0 : i32
    %c0_i32_0 = arith.constant 0 : i32
    %c0_i32_1 = arith.constant 0 : i32
    return %arg0, %c0_i32, %1, %c0_i32_0 : i32, i32, i32, i32
  }
  func.func @transform_1(%arg0: i32, %arg1: i32, %arg2: i32) -> (i32, i32, i32, i32) {
    %c1_i32 = arith.constant 1 : i32
    %0 = arith.muli %arg1, %c1_i32 : i32
    %1 = arith.addi %0, %arg2 : i32
    %c0_i32 = arith.constant 0 : i32
    %c0_i32_0 = arith.constant 0 : i32
    %c0_i32_1 = arith.constant 0 : i32
    return %arg0, %c0_i32, %1, %c0_i32_0 : i32, i32, i32, i32
  }
  func.func @transform_2(%arg0: i32, %arg1: i32, %arg2: i32) -> (i32, i32) {
    %c0_i32 = arith.constant 0 : i32
    %c0_i32_0 = arith.constant 0 : i32
    %c0_i32_1 = arith.constant 0 : i32
    return %c0_i32, %c0_i32_0 : i32, i32
  }
  func.func @transform_3(%arg0: i32, %arg1: i32, %arg2: i32) -> (i32, i32) {
    %c0_i32 = arith.constant 0 : i32
    %c0_i32_0 = arith.constant 0 : i32
    %c0_i32_1 = arith.constant 0 : i32
    return %c0_i32, %c0_i32_0 : i32, i32
  }
  func.func @transform_4(%arg0: i32, %arg1: i32, %arg2: i32) -> (i32, i32) {
    %c0_i32 = arith.constant 0 : i32
    %c0_i32_0 = arith.constant 0 : i32
    %c0_i32_1 = arith.constant 0 : i32
    return %c0_i32, %c0_i32_0 : i32, i32
  }
  func.func @transform_5(%arg0: i32, %arg1: i32, %arg2: i32) -> (i32, i32, i32, i32) {
    %c0_i32 = arith.constant 0 : i32
    %c0_i32_0 = arith.constant 0 : i32
    %c0_i32_1 = arith.constant 0 : i32
    return %arg0, %arg1, %c0_i32, %c0_i32_0 : i32, i32, i32, i32
  }
}

</mosaic_0001>

<llo_original>
// kernel: standard_diffusion_loss_forward.11
$region0: #{standard_diffusion_loss_forward.11}
  #allocation0 [shape = 'u32[]', space=smem, size = 0x4, offset = 0x4, fixed_abs, tag = 'smem constant byte address 0x4 - core index']
  #allocation1 [shape = 'u32[144,128]{1,0:T(1,128)}', space=vmem, size = 0x12000, scoped, tag = 'internal scratch']
  %s0 = inlined_call_operand.vmem [shape: f32[2,4,8,128], index: 0, kind: input, shape index: {}]
  %s1 = inlined_call_operand.vmem [shape: f32[2,4,8,128], index: 1, kind: input, shape index: {}]
  %s2 = inlined_call_operand.vmem [shape: f32[2,2], index: 2, kind: input, shape index: {}]
  %s3 = inlined_call_operand.vmem [shape: f32[2,16], index: 3, kind: input, shape index: {}]
  %s4 = inlined_call_operand.vmem [shape: f32[2,4], index: 4, kind: input, shape index: {}]
  %s5 = inlined_call_operand.vmem [shape: f32[2,1,8,128], index: 5, kind: output, shape index: {}]
  %s6 = sld [smem:[#allocation0]]
  $region77: #{standard_diffusion_loss_forward.11} parent=0
    _
  %s8 = ssub.s32 1, %s6
  %s9 = scalar_select 0, %s8, %s6
  $region1: #{standard_diffusion_loss_forward.11} parent=0
    #allocation2 [shape = 'u8[1024]{0}', space=smem, size = 0x400, scoped, tag = 'input window, operand 2, single buffered']
    #allocation3 [shape = 's32[2]{0}', space=sflag, size = 0x8, scoped, tag = 'scoped memory for standard_diffusion_loss_forward.11']
    #allocation4 [shape = 'u8[1024]{0}', space=smem, size = 0x400, scoped, tag = 'input window, operand 3, single buffered']
    #allocation5 [shape = 's32[1]{0}', space=sflag, size = 0x4, scoped, tag = 'scoped memory for standard_diffusion_loss_forward.11']
    #allocation6 [shape = 'u8[1024]{0}', space=smem, size = 0x400, scoped, tag = 'input window, operand 4, single buffered']
    %10 = vsyncpa [#allocation3], 0
    %11 = vsyncpa [#allocation5], 0
    loop: start=0, step=1, limit=4
    $region2: #{standard_diffusion_loss_forward.11} parent=1 // loop_pre_header
      _
    $region3: #{standard_diffusion_loss_forward.11} parent=1 // loop_header
      %s13 = sphi 0, %s17
      %p14 = scmp.ge.s32.totalorder %s13, 4
      %s20 = sphi 0, %s39
      %s21 = sphi 0, %s35
      %s22 = sphi 0, %s31
      %s23 = sphi 0, %s20
      %s24 = sphi 0, %s21
      %s25 = sphi 0, %s22
      %s26 = sphi 0, %s23
      %s27 = sphi 0, %s24
      %s28 = sphi 0, %s25
      %s46 = sphi 0, %s48
      %s49 = sphi 0, %s46
      %s50 = sphi 0, %s49
      %s66 = sphi 0, %s50
      %s76 = sphi 0, %s78
      %s79 = sphi 0, %s76
      %s80 = sphi 0, %s79
      %s96 = sphi 0, %s80
      %s100 = sphi 0, %s100
      %s102 = sphi 0, %s100
      %s103 = sphi 0, %s102
      %s117 = sphi 0, %s103
      %s121 = sphi 0, %s121
      %s123 = sphi 0, %s121
      %s124 = sphi 0, %s123
      %s138 = sphi 0, %s124
      %s142 = sphi 0, %s142
      %s144 = sphi 0, %s142
      %s145 = sphi 0, %s144
      %s159 = sphi 0, %s145
      %s167 = sphi 0, %s169
      %s170 = sphi 0, %s167
      %s171 = sphi 0, %s170
      %s187 = sphi 0, %s171
    $region4: #{standard_diffusion_loss_forward.11} parent=1 // loop_header_branch
      %16 = sbr.rel (%p14) target = $region8
    $region5: #{standard_diffusion_loss_forward.11} parent=1 // loop_body
      %s18 = ssub.s32 %s13, 1
      %s19 = ssub.s32 %s13, 2
      %s29 = sadd.s32 1, %s22
      %p30 = scmp.ge.s32.totalorder %s29, 1
      %s31 = scalar_select %p30, 0, %s29
      %s32 = sadd.s32 1, %s21
      %s33 = scalar_select %p30, %s32, %s21
      %p34 = scmp.ge.s32.totalorder %s33, 1
      %s35 = scalar_select %p34, 0, %s33
      %s36 = sadd.s32 1, %s20
      %s37 = scalar_select %p34, %s36, %s20
      %p38 = scmp.ge.s32.totalorder %s37, 2
      %s39 = scalar_select %p38, 0, %s37
      %s40 = sadd.s32 %s21, %s22
      %s41 = sadd.s32 %s35, %s31
      %s42 = ssub.s32 %s20, %s39
      %s43 = ssub.s32 %s40, %s41
      %s44 = sor.u32 %s42, %s43
      %p45 = scmp.eq.s32.totalorder %s44, 0
      %s47 = sadd.s32 %s46, 1
      %s48 = scalar_select %p45, %s46, %s47
      %p51 = pneg %p45
      %p52 = scmp.eq.s32.totalorder %s13, 1
      %p53 = por %p51, %p52
      %p54 = scmp.ne.s32.totalorder %s46, %s49
      %p55 = scmp.eq.s32.totalorder %s13, 0
      %p56 = por %p54, %p55
      %p57 = scmp.ne.s32.totalorder %s46, %s49
      %p58 = scmp.eq.s32.totalorder %s18, 1
      %p59 = por %p57, %p58
      %p60 = scmp.ne.s32.totalorder %s49, %s50
      %p61 = scmp.eq.s32.totalorder %s18, 0
      %p62 = por %p60, %p61
      %p63 = scmp.ne.s32.totalorder %s49, %s50
      %p64 = scmp.eq.s32.totalorder %s19, 1
      %p65 = por %p63, %p64
      %p67 = scmp.ne.s32.totalorder %s50, %s66
      %p68 = scmp.eq.s32.totalorder %s19, 0
      %p69 = por %p67, %p68
      %s70 = sadd.s32 %s21, %s22
      %s71 = sadd.s32 %s35, %s31
      %s72 = ssub.s32 %s20, %s39
      %s73 = ssub.s32 %s70, %s71
      %s74 = sor.u32 %s72, %s73
      %p75 = scmp.eq.s32.totalorder %s74, 0
      %s77 = sadd.s32 %s76, 1
      %s78 = scalar_select %p75, %s76, %s77
      %p81 = pneg %p75
      %p82 = scmp.eq.s32.totalorder %s13, 1
      %p83 = por %p81, %p82
      %p84 = scmp.ne.s32.totalorder %s76, %s79
      %p85 = scmp.eq.s32.totalorder %s13, 0
      %p86 = por %p84, %p85
      %p87 = scmp.ne.s32.totalorder %s76, %s79
      %p88 = scmp.eq.s32.totalorder %s18, 1
      %p89 = por %p87, %p88
      %p90 = scmp.ne.s32.totalorder %s79, %s80
      %p91 = scmp.eq.s32.totalorder %s18, 0
      %p92 = por %p90, %p91
      %p93 = scmp.ne.s32.totalorder %s79, %s80
      %p94 = scmp.eq.s32.totalorder %s19, 1
      %p95 = por %p93, %p94
      %p97 = scmp.ne.s32.totalorder %s80, %s96
      %p98 = scmp.eq.s32.totalorder %s19, 0
      %p99 = por %p97, %p98
      %s101 = sadd.s32 %s100, 1
      %p104 = scmp.eq.s32.totalorder %s13, 1
      %p105 = scmp.ne.s32.totalorder %s100, %s102
      %p106 = scmp.eq.s32.totalorder %s13, 0
      %p107 = por %p105, %p106
      %p108 = scmp.ne.s32.totalorder %s100, %s102
      %p109 = scmp.eq.s32.totalorder %s18, 1
      %p110 = por %p108, %p109
      %p111 = scmp.ne.s32.totalorder %s102, %s103
      %p112 = scmp.eq.s32.totalorder %s18, 0
      %p113 = por %p111, %p112
      %p114 = scmp.ne.s32.totalorder %s102, %s103
      %p115 = scmp.eq.s32.totalorder %s19, 1
      %p116 = por %p114, %p115
      %p118 = scmp.ne.s32.totalorder %s103, %s117
      %p119 = scmp.eq.s32.totalorder %s19, 0
      %p120 = por %p118, %p119
      %s122 = sadd.s32 %s121, 1
      %p125 = scmp.eq.s32.totalorder %s13, 1
      %p126 = scmp.ne.s32.totalorder %s121, %s123
      %p127 = scmp.eq.s32.totalorder %s13, 0
      %p128 = por %p126, %p127
      %p129 = scmp.ne.s32.totalorder %s121, %s123
      %p130 = scmp.eq.s32.totalorder %s18, 1
      %p131 = por %p129, %p130
      %p132 = scmp.ne.s32.totalorder %s123, %s124
      %p133 = scmp.eq.s32.totalorder %s18, 0
      %p134 = por %p132, %p133
      %p135 = scmp.ne.s32.totalorder %s123, %s124
      %p136 = scmp.eq.s32.totalorder %s19, 1
      %p137 = por %p135, %p136
      %p139 = scmp.ne.s32.totalorder %s124, %s138
      %p140 = scmp.eq.s32.totalorder %s19, 0
      %p141 = por %p139, %p140
      %s143 = sadd.s32 %s142, 1
      %p146 = scmp.eq.s32.totalorder %s13, 1
      %p147 = scmp.ne.s32.totalorder %s142, %s144
      %p148 = scmp.eq.s32.totalorder %s13, 0
      %p149 = por %p147, %p148
      %p150 = scmp.ne.s32.totalorder %s142, %s144
      %p151 = scmp.eq.s32.totalorder %s18, 1
      %p152 = por %p150, %p151
      %p153 = scmp.ne.s32.totalorder %s144, %s145
      %p154 = scmp.eq.s32.totalorder %s18, 0
      %p155 = por %p153, %p154
      %p156 = scmp.ne.s32.totalorder %s144, %s145
      %p157 = scmp.eq.s32.totalorder %s19, 1
      %p158 = por %p156, %p157
      %p160 = scmp.ne.s32.totalorder %s145, %s159
      %p161 = scmp.eq.s32.totalorder %s19, 0
      %p162 = por %p160, %p161
      %s163 = ssub.s32 %s20, %s39
      %s164 = ssub.s32 %s21, %s35
      %s165 = sor.u32 %s163, %s164
      %p166 = scmp.eq.s32.totalorder %s165, 0
      %s168 = sadd.s32 %s167, 1
      %s169 = scalar_select %p166, %s167, %s168
      %p172 = pneg %p166
      %p173 = scmp.eq.s32.totalorder %s13, 1
      %p174 = por %p172, %p173
      %p175 = scmp.ne.s32.totalorder %s167, %s170
      %p176 = scmp.eq.s32.totalorder %s13, 0
      %p177 = por %p175, %p176
      %p178 = scmp.ne.s32.totalorder %s167, %s170
      %p179 = scmp.eq.s32.totalorder %s18, 1
      %p180 = por %p178, %p179
      %p181 = scmp.ne.s32.totalorder %s170, %s171
      %p182 = scmp.eq.s32.totalorder %s18, 0
      %p183 = por %p181, %p182
      %p184 = scmp.ne.s32.totalorder %s170, %s171
      %p185 = scmp.eq.s32.totalorder %s19, 1
      %p186 = por %p184, %p185
      %p188 = scmp.ne.s32.totalorder %s171, %s187
      %p189 = scmp.eq.s32.totalorder %s19, 0
      %p190 = por %p188, %p189
      %p191 = scmp.le.s32.totalorder 1, %s13
      %p192 = scmp.lt.s32.totalorder %s13, 3
      %p193 = pnand %p191, %p192
      %p194 = pneg %p193
      // Predicated region
      $region9: #{standard_diffusion_loss_forward.11} parent=5 // pred_check
        _
      $region10: #{standard_diffusion_loss_forward.11} parent=5 // pred_check_branch
        %196 = sbr.rel (%p193) target = $region12
      $region11: #{standard_diffusion_loss_forward.11} parent=5 // pred_region
        %s197 = ssub.s32 %s13, 1
        // Predicated region
        $region13: #{standard_diffusion_loss_forward.11} parent=11 // pred_check
          %p198 = pneg %p113
        $region14: #{standard_diffusion_loss_forward.11} parent=11 // pred_check_branch
          %200 = sbr.rel (%p198) target = $region16
        $region15: #{standard_diffusion_loss_forward.11} parent=11 // pred_region
          %s202 = ssub.s32 32, 32
          %203 = vsyncadd [#allocation3], %s202
          %s205 = sshll.u32 %s2, 4
          %s206 = int_to_ptr.vmem [resolvable:$true] %s205
          %208 = dma.vmem_to_smem %s206, 32, [#allocation2], [#allocation3]
        $region16: #{standard_diffusion_loss_forward.11} parent=11 // pred_fallthru
          _
        // Predicated region
        $region17: #{standard_diffusion_loss_forward.11} parent=11 // pred_check
          %p209 = pneg %p134
        $region18: #{standard_diffusion_loss_forward.11} parent=11 // pred_check_branch
          %211 = sbr.rel (%p209) target = $region20
        $region19: #{standard_diffusion_loss_forward.11} parent=11 // pred_region
          %s213 = ssub.s32 32, 32
          %214 = vsyncadd [#allocation5], %s213
          %s216 = sshll.u32 %s3, 4
          %s217 = int_to_ptr.vmem [resolvable:$true] %s216
          %219 = dma.vmem_to_smem %s217, 32, [#allocation4], [#allocation5]
        $region20: #{standard_diffusion_loss_forward.11} parent=11 // pred_fallthru
          _
        // Predicated region
        $region21: #{standard_diffusion_loss_forward.11} parent=11 // pred_check
          %p220 = pneg %p155
        $region22: #{standard_diffusion_loss_forward.11} parent=11 // pred_check_branch
          %222 = sbr.rel (%p220) target = $region24
        $region23: #{standard_diffusion_loss_forward.11} parent=11 // pred_region
          %s224 = ssub.s32 32, 32
          %225 = vsyncadd [#allocation5], %s224
          %s227 = sshll.u32 %s4, 4
          %s228 = int_to_ptr.vmem [resolvable:$true] %s227
          %230 = dma.vmem_to_smem %s228, 32, [#allocation6], [#allocation5]
        $region24: #{standard_diffusion_loss_forward.11} parent=11 // pred_fallthru
          _
      $region12: #{standard_diffusion_loss_forward.11} parent=5 // pred_fallthru
        _
      %p231 = scmp.lt.s32.totalorder %s13, 2
      // Predicated region
      $region25: #{standard_diffusion_loss_forward.11} parent=5 // pred_check
        %p232 = pneg %p231
      $region26: #{standard_diffusion_loss_forward.11} parent=5 // pred_check_branch
        %234 = sbr.rel (%p232) target = $region28
      $region27: #{standard_diffusion_loss_forward.11} parent=5 // pred_region
        // Predicated region
        $region29: #{standard_diffusion_loss_forward.11} parent=27 // pred_check
          %p235 = pneg %p56
        $region30: #{standard_diffusion_loss_forward.11} parent=27 // pred_check_branch
          %237 = sbr.rel (%p235) target = $region32
        $region31: #{standard_diffusion_loss_forward.11} parent=27 // pred_region
          %s238 = sadd.s32 %s21, %s22
          %p239 = scmp.lt.s32.totalorder %s20, 1
          %s240 = scalar_select %p239, %s20, 1
          %p241 = scmp.lt.s32.totalorder %s238, 0
          %s242 = scalar_select %p241, %s238, 0
          %s243 = smul.addr %s240, 4
          %s244 = sadd.s32 %s242, %s243
          %s245 = smul.addr %s244, 8
          %s246 = scalar_lea.vmem %s0, %s245
          %s247 = sadd.s32 %s21, %s22
        $region32: #{standard_diffusion_loss_forward.11} parent=27 // pred_fallthru
          _
        // Predicated region
        $region33: #{standard_diffusion_loss_forward.11} parent=27 // pred_check
          %p248 = pneg %p86
        $region34: #{standard_diffusion_loss_forward.11} parent=27 // pred_check_branch
          %250 = sbr.rel (%p248) target = $region36
        $region35: #{standard_diffusion_loss_forward.11} parent=27 // pred_region
          %s251 = sadd.s32 %s21, %s22
          %p252 = scmp.lt.s32.totalorder %s20, 1
          %s253 = scalar_select %p252, %s20, 1
          %p254 = scmp.lt.s32.totalorder %s251, 0
          %s255 = scalar_select %p254, %s251, 0
          %s256 = smul.addr %s253, 4
          %s257 = sadd.s32 %s255, %s256
          %s258 = smul.addr %s257, 8
          %s259 = scalar_lea.vmem %s1, %s258
          %s260 = sadd.s32 %s21, %s22
        $region36: #{standard_diffusion_loss_forward.11} parent=27 // pred_fallthru
          _
      $region28: #{standard_diffusion_loss_forward.11} parent=5 // pred_fallthru
        _
      %p261 = scmp.le.s32.totalorder 1, %s13
      %p262 = scmp.lt.s32.totalorder %s13, 3
      %p263 = pnand %p261, %p262
      %p264 = pneg %p263
      // Predicated region
      $region37: #{standard_diffusion_loss_forward.11} parent=5 // pred_check
        _
      $region38: #{standard_diffusion_loss_forward.11} parent=5 // pred_check_branch
        %266 = sbr.rel (%p263) target = $region40
      $region39: #{standard_diffusion_loss_forward.11} parent=5 // pred_region
        %s267 = ssub.s32 %s13, 1
        // Predicated region
        $region41: #{standard_diffusion_loss_forward.11} parent=39 // pred_check
          %p268 = pneg %p113
        $region42: #{standard_diffusion_loss_forward.11} parent=39 // pred_check_branch
          %270 = sbr.rel (%p268) target = $region44
        $region43: #{standard_diffusion_loss_forward.11} parent=39 // pred_region
          %271 = dma.done [#allocation3], 32
        $region44: #{standard_diffusion_loss_forward.11} parent=39 // pred_fallthru
          _
        // Predicated region
        $region45: #{standard_diffusion_loss_forward.11} parent=39 // pred_check
          %p272 = pneg %p134
        $region46: #{standard_diffusion_loss_forward.11} parent=39 // pred_check_branch
          %274 = sbr.rel (%p272) target = $region48
        $region47: #{standard_diffusion_loss_forward.11} parent=39 // pred_region
          %275 = dma.done [#allocation5], 32
        $region48: #{standard_diffusion_loss_forward.11} parent=39 // pred_fallthru
          _
        // Predicated region
        $region49: #{standard_diffusion_loss_forward.11} parent=39 // pred_check
          %p276 = pneg %p155
        $region50: #{standard_diffusion_loss_forward.11} parent=39 // pred_check_branch
          %278 = sbr.rel (%p276) target = $region52
        $region51: #{standard_diffusion_loss_forward.11} parent=39 // pred_region
          %279 = dma.done [#allocation5], 32
        $region52: #{standard_diffusion_loss_forward.11} parent=39 // pred_fallthru
          _
        %280 = sfence
        %s281 = sadd.s32 %s24, %s25
        %p282 = scmp.lt.s32.totalorder %s23, 1
        %s283 = scalar_select %p282, %s23, 1
        %p284 = scmp.lt.s32.totalorder %s281, 0
        %s285 = scalar_select %p284, %s281, 0
        %s286 = smul.addr %s283, 4
        %s287 = sadd.s32 %s285, %s286
        %s288 = smul.addr %s287, 8
        %s289 = scalar_lea.vmem %s0, %s288
        %p290 = pneg %p62
        %p291 = pneg %p59
        %s292 = sadd.s32 %s24, %s25
        %p293 = scmp.lt.s32.totalorder %s23, 1
        %s294 = scalar_select %p293, %s23, 1
        %p295 = scmp.lt.s32.totalorder %s292, 0
        %s296 = scalar_select %p295, %s292, 0
        %s297 = smul.addr %s294, 4
        %s298 = sadd.s32 %s296, %s297
        %s299 = smul.addr %s298, 8
        %s300 = scalar_lea.vmem %s1, %s299
        %p301 = pneg %p92
        %p302 = pneg %p89
        %p303 = pneg %p113
        %p304 = pneg %p110
        %p305 = pneg %p134
        %p306 = pneg %p131
        %p307 = pneg %p155
        %p308 = pneg %p152
        %p309 = pneg %p183
        %p310 = pneg %p180
        %p311 = scmp.lt.s32.totalorder %s23, 1
        %s312 = scalar_select %p311, %s23, 1
        %p313 = scmp.lt.s32.totalorder %s24, 0
        %s314 = scalar_select %p313, %s24, 0
        %s315 = sadd.s32 %s314, %s312
        %s316 = smul.addr %s315, 8
        %s317 = scalar_lea.vmem %s5, %s316
        %s318 = sadd.s32 %s24, %s25
        %p319 = scmp.lt.s32.totalorder %s23, 1
        %s320 = scalar_select %p319, %s23, 1
        %p321 = scmp.lt.s32.totalorder %s318, 0
        %s322 = scalar_select %p321, %s318, 0
        %s323 = smul.addr %s320, 4
        %s324 = sadd.s32 %s322, %s323
        %s325 = smul.addr %s324, 8
        %s326 = scalar_lea.vmem %s0, %s325
        %s327 = sadd.s32 %s24, %s25
        %s328 = sadd.s32 %s24, %s25
        %p329 = scmp.lt.s32.totalorder %s23, 1
        %s330 = scalar_select %p329, %s23, 1
        %p331 = scmp.lt.s32.totalorder %s328, 0
        %s332 = scalar_select %p331, %s328, 0
        %s333 = smul.addr %s330, 4
        %s334 = sadd.s32 %s332, %s333
        %s335 = smul.addr %s334, 8
        %s336 = scalar_lea.vmem %s1, %s335
        %s337 = sadd.s32 %s24, %s25
        %p338 = scmp.lt.s32.totalorder %s23, 1
        %s339 = scalar_select %p338, %s23, 1
        %p340 = scmp.lt.s32.totalorder %s24, 0
        %s341 = scalar_select %p340, %s24, 0
        %s342 = sadd.s32 %s341, %s339
        %s343 = smul.addr %s342, 8
        %s344 = scalar_lea.vmem %s5, %s343
        %p345 = scmp.eq.s32.totalorder %s25, 0
        // Predicated region
        $region53: #{standard_diffusion_loss_forward.11} parent=39 // pred_check
          %p346 = pneg %p345
        $region54: #{standard_diffusion_loss_forward.11} parent=39 // pred_check_branch
          %348 = sbr.rel (%p346) target = $region56
        $region55: #{standard_diffusion_loss_forward.11} parent=39 // pred_region
          %349 = vst [vmem:[%s344] sm:$0xff] 0.0
        $region56: #{standard_diffusion_loss_forward.11} parent=39 // pred_fallthru
          _
        %s350 = sld [smem:[#allocation2 + %s23]]
        %s351 = sshra.s32 %s23, 7
        %s352 = sand.u32 %s23, 127
        %s353 = sadd.s32 %s351, 1
        %s354 = smul.u32 %s353, 128
        %s355 = sshra.s32 %s23, 7
        %s356 = sand.u32 %s23, 127
        %s357 = sadd.s32 %s354, %s356
        %s358 = sld [smem:[#allocation2 + %s357]]
        %v359 = vld [vmem:[%s326] sm:$0xff]
        %v360 = vld [vmem:[%s336] sm:$0xff]
        %v361 = vstv %s350
        %v362 = vmul.f32 %v361, %v360
        %v363 = vadd.f32 %v359, %v362
        %s364 = scalar_lea.vmem %s326, 8
        %v365 = vld [vmem:[%s364] sm:$0xff]
        %s366 = scalar_lea.vmem %s336, 8
        %v367 = vld [vmem:[%s366] sm:$0xff]
        %v368 = vmul.f32 %v361, %v367
        %v369 = vadd.f32 %v365, %v368
        %s370 = scalar_lea.vmem %s326, 16
        %v371 = vld [vmem:[%s370] sm:$0xff]
        %s372 = scalar_lea.vmem %s336, 16
        %v373 = vld [vmem:[%s372] sm:$0xff]
        %v374 = vmul.f32 %v361, %v373
        %v375 = vadd.f32 %v371, %v374
        %s376 = scalar_lea.vmem %s326, 24
        %v377 = vld [vmem:[%s376] sm:$0xff]
        %s378 = scalar_lea.vmem %s336, 24
        %v379 = vld [vmem:[%s378] sm:$0xff]
        %v380 = vmul.f32 %v361, %v379
        %v381 = vadd.f32 %v377, %v380
        %s382 = smul.u32 %s23, 128
        %s383 = sld [smem:[#allocation4 + %s382]]
        %v384 = vstv %s383
        %v385 = vmul.f32 %v363, %v384
        %s386 = sadd.s32 %s382, 4
        %s387 = sld [smem:[#allocation4 + %s386]]
        %v388 = vstv %s387
        %v389 = vmul.f32 %v388, %v369
        %v390 = vadd.f32 %v385, %v389
        %s391 = sadd.s32 %s382, 8
        %s392 = sld [smem:[#allocation4 + %s391]]
        %v393 = vstv %s392
        %v394 = vmul.f32 %v393, %v375
        %v395 = vadd.f32 %v390, %v394
        %s396 = sadd.s32 %s382, 12
        %s397 = sld [smem:[#allocation4 + %s396]]
        %v398 = vstv %s397
        %v399 = vmul.f32 %v398, %v381
        %v400 = vadd.f32 %v395, %v399
        %v401 = vstv %s358
        %v402 = vmul.f32 %v401, %v363
        %v403 = vsub.f32 %v402, %v359
        %s404 = sld [smem:[#allocation6 + %s382]]
        %v405 = vstv %s404
        %v406 = vadd.f32 %v403, %v405
        %v407 = vadd.f32 %v400, %v406
        %v408 = vmul.f32 %v407, %v407
        %s409 = sadd.s32 %s382, 1
        %s410 = sld [smem:[#allocation4 + %s409]]
        %v411 = vstv %s410
        %v412 = vmul.f32 %v363, %v411
        %s413 = sadd.s32 %s382, 5
        %s414 = sld [smem:[#allocation4 + %s413]]
        %v415 = vstv %s414
        %v416 = vmul.f32 %v415, %v369
        %v417 = vadd.f32 %v412, %v416
        %s418 = sadd.s32 %s382, 9
        %s419 = sld [smem:[#allocation4 + %s418]]
        %v420 = vstv %s419
        %v421 = vmul.f32 %v420, %v375
        %v422 = vadd.f32 %v417, %v421
        %s423 = sadd.s32 %s382, 13
        %s424 = sld [smem:[#allocation4 + %s423]]
        %v425 = vstv %s424
        %v426 = vmul.f32 %v425, %v381
        %v427 = vadd.f32 %v422, %v426
        %v428 = vmul.f32 %v401, %v369
        %v429 = vsub.f32 %v428, %v365
        %s430 = sld [smem:[#allocation6 + %s409]]
        %v431 = vstv %s430
        %v432 = vadd.f32 %v429, %v431
        %v433 = vadd.f32 %v427, %v432
        %v434 = vmul.f32 %v433, %v433
        %v435 = vadd.f32 %v408, %v434
        %s436 = sadd.s32 %s382, 2
        %s437 = sld [smem:[#allocation4 + %s436]]
        %v438 = vstv %s437
        %v439 = vmul.f32 %v363, %v438
        %s440 = sadd.s32 %s382, 6
        %s441 = sld [smem:[#allocation4 + %s440]]
        %v442 = vstv %s441
        %v443 = vmul.f32 %v442, %v369
        %v444 = vadd.f32 %v439, %v443
        %s445 = sadd.s32 %s382, 10
        %s446 = sld [smem:[#allocation4 + %s445]]
        %v447 = vstv %s446
        %v448 = vmul.f32 %v447, %v375
        %v449 = vadd.f32 %v444, %v448
        %s450 = sadd.s32 %s382, 14
        %s451 = sld [smem:[#allocation4 + %s450]]
        %v452 = vstv %s451
        %v453 = vmul.f32 %v452, %v381
        %v454 = vadd.f32 %v449, %v453
        %v455 = vmul.f32 %v401, %v375
        %v456 = vsub.f32 %v455, %v371
        %s457 = sld [smem:[#allocation6 + %s436]]
        %v458 = vstv %s457
        %v459 = vadd.f32 %v456, %v458
        %v460 = vadd.f32 %v454, %v459
        %v461 = vmul.f32 %v460, %v460
        %v462 = vadd.f32 %v435, %v461
        %s463 = sadd.s32 %s382, 3
        %s464 = sld [smem:[#allocation4 + %s463]]
        %v465 = vstv %s464
        %v466 = vmul.f32 %v363, %v465
        %s467 = sadd.s32 %s382, 7
        %s468 = sld [smem:[#allocation4 + %s467]]
        %v469 = vstv %s468
        %v470 = vmul.f32 %v469, %v369
        %v471 = vadd.f32 %v466, %v470
        %s472 = sadd.s32 %s382, 11
        %s473 = sld [smem:[#allocation4 + %s472]]
        %v474 = vstv %s473
        %v475 = vmul.f32 %v474, %v375
        %v476 = vadd.f32 %v471, %v475
        %s477 = sadd.s32 %s382, 15
        %s478 = sld [smem:[#allocation4 + %s477]]
        %v479 = vstv %s478
        %v480 = vmul.f32 %v479, %v381
        %v481 = vadd.f32 %v476, %v480
        %v482 = vmul.f32 %v401, %v381
        %v483 = vsub.f32 %v482, %v377
        %s484 = sld [smem:[#allocation6 + %s463]]
        %v485 = vstv %s484
        %v486 = vadd.f32 %v483, %v485
        %v487 = vadd.f32 %v481, %v486
        %v488 = vmul.f32 %v487, %v487
        %v489 = vadd.f32 %v462, %v488
        %s490 = sadd.s32 %s24, %s25
        %p491 = scmp.ge.s32.totalorder %s490, 0
        // Predicated region
        $region57: #{standard_diffusion_loss_forward.11} parent=39 // pred_check
          %p492 = pneg %p491
        $region58: #{standard_diffusion_loss_forward.11} parent=39 // pred_check_branch
          %494 = sbr.rel (%p492) target = $region60
        $region59: #{standard_diffusion_loss_forward.11} parent=39 // pred_region
          %v495 = vlaneseq
          %v496 = vshrl.u32 %v495, 7
          %v497 = vlaneseq
          %v498 = vand.u32 %v497, 127
          %s499 = smul.u32 %s490, 8
          %v500 = vstv %s499
          %v501 = vadd.s32 %v500, %v496
          %v502 = vmul.u32 %v501, 128
          %v503 = vadd.s32 %v502, %v498
          %vm504 = vcmp.lt.s32.totalorder %v503, 256
          %v505 = vsel %vm504, %v489, 0.0
          %v506 = vld [vmem:[%s344] sm:$0xff]
          %v507 = vadd.f32 %v505, 0.0
          %v508 = vadd.f32 %v506, %v507
          %509 = vst [vmem:[%s344] sm:$0xff] %v508
        $region60: #{standard_diffusion_loss_forward.11} parent=39 // pred_fallthru
          _
        %p510 = scmp.lt.s32.totalorder %s490, 0
        // Predicated region
        $region61: #{standard_diffusion_loss_forward.11} parent=39 // pred_check
          %p511 = pneg %p510
        $region62: #{standard_diffusion_loss_forward.11} parent=39 // pred_check_branch
          %513 = sbr.rel (%p511) target = $region64
        $region63: #{standard_diffusion_loss_forward.11} parent=39 // pred_region
          %v514 = vld [vmem:[%s344] sm:$0xff]
          %v515 = vadd.f32 %v489, 0.0
          %v516 = vadd.f32 %v514, %v515
          %517 = vst [vmem:[%s344] sm:$0xff] %v516
        $region64: #{standard_diffusion_loss_forward.11} parent=39 // pred_fallthru
          _
        %p518 = scmp.lt.s32.totalorder %s23, 1
        %s519 = scalar_select %p518, %s23, 1
        %p520 = scmp.lt.s32.totalorder %s24, 0
        %s521 = scalar_select %p520, %s24, 0
        %s522 = sadd.s32 %s521, %s519
        %s523 = smul.addr %s522, 8
        %s524 = scalar_lea.vmem %s5, %s523
        // Predicated region
        $region65: #{standard_diffusion_loss_forward.11} parent=39 // pred_check
          %p525 = pneg %p180
        $region66: #{standard_diffusion_loss_forward.11} parent=39 // pred_check_branch
          %527 = sbr.rel (%p525) target = $region68
        $region67: #{standard_diffusion_loss_forward.11} parent=39 // pred_region
          _
        $region68: #{standard_diffusion_loss_forward.11} parent=39 // pred_fallthru
          _
      $region40: #{standard_diffusion_loss_forward.11} parent=5 // pred_fallthru
        _
      %p528 = scmp.le.s32.totalorder 2, %s13
      // Predicated region
      $region69: #{standard_diffusion_loss_forward.11} parent=5 // pred_check
        %p529 = pneg %p528
      $region70: #{standard_diffusion_loss_forward.11} parent=5 // pred_check_branch
        %531 = sbr.rel (%p529) target = $region72
      $region71: #{standard_diffusion_loss_forward.11} parent=5 // pred_region
        %s532 = ssub.s32 %s13, 2
        // Predicated region
        $region73: #{standard_diffusion_loss_forward.11} parent=71 // pred_check
          %p533 = pneg %p186
        $region74: #{standard_diffusion_loss_forward.11} parent=71 // pred_check_branch
          %535 = sbr.rel (%p533) target = $region76
        $region75: #{standard_diffusion_loss_forward.11} parent=71 // pred_region
          %p536 = scmp.lt.s32.totalorder %s26, 1
          %s537 = scalar_select %p536, %s26, 1
          %p538 = scmp.lt.s32.totalorder %s27, 0
          %s539 = scalar_select %p538, %s27, 0
          %s540 = sadd.s32 %s539, %s537
          %s541 = smul.addr %s540, 8
          %s542 = scalar_lea.vmem %s5, %s541
        $region76: #{standard_diffusion_loss_forward.11} parent=71 // pred_fallthru
          _
      $region72: #{standard_diffusion_loss_forward.11} parent=5 // pred_fallthru
        _
    $region6: #{standard_diffusion_loss_forward.11} parent=1 // loop_footer
      %s17 = sadd.s32 1, %s13
    $region7: #{standard_diffusion_loss_forward.11} parent=1 // loop_footer_branch
      %12 = sbr.rel target = $region3
    $region8: #{standard_diffusion_loss_forward.11} parent=1 // loop_exit
      _
    %543 = vsyncpa [#allocation3], 1
    %s544 = scalar_lea.sflag [#allocation3], 1
    %545 = vsyncpa %s544, 1
    %546 = vsyncpa [#allocation5], 1

</llo_original>
